<compile_context>
chip_gen: v7x
topology: tpu7x:2x2x1
jax: 0.10.0
libtpu: 0.0.40
codegen_flags: <defaults>
</compile_context>

<pallas_src>
from collections import OrderedDict
import math

import jax
import jax.numpy as jnp
from jax.experimental import pallas as pl
from jax.experimental.pallas import tpu as pltpu


def _round_up(x, m):
    return (x + m - 1) // m * m


_B_TILE = 8          # sublane-aligned batch tile
_D_TILE_MAX = 512    # feature-reduction tile (multiple of 128 lanes)
# Per-step VMEM (double-buffered, bf16):
#   x tile : 2 * B_TILE * D_tile * 2 B
#   W1 tile: 2 * D_tile * PH_pad * 2 B
# With D_tile = 512 and PH_pad in the low hundreds this is well below the
# scoped-VMEM defaults of 16 MiB (v5e) / 32 MiB (v6e, v7x) and v7x's 64 MiB
# physical VMEM; enlarge _D_TILE_MAX only after re-checking the budget.


def _fused_kernel(x_ref, w1_ref, b1_ref, w2bd_ref, b2_ref, o_ref, acc_ref):
    """One (batch-tile, D-tile) grid step of the fused multi-professor MLP.

    x_ref   : (Bt, Dt)        bf16 feature tile (shared by all professors)
    w1_ref  : (Dt, PH_pad)    bf16 D-slice of the professor-fused first layer
    b1_ref  : (1, PH_pad)     f32
    w2bd_ref: (PH_pad, P_pad) f32 block-diagonal second layer (w2 folded in)
    b2_ref  : (1, P_pad)      f32
    o_ref   : (Bt, P_pad)     f32 output (professors on the lane axis)
    acc_ref : (Bt, PH_pad)    f32 VMEM accumulator over the D reduction
    """
    d = pl.program_id(1)

    @pl.when(d == 0)
    def _():
        acc_ref[...] = jnp.zeros_like(acc_ref)

    # Lane-dense MXU matmul: all professors' hidden units share the N axis.
    acc_ref[...] += jnp.dot(
        x_ref[...], w1_ref[...], preferred_element_type=jnp.float32)

    @pl.when(d == pl.num_programs(1) - 1)
    def _():
        h = jnp.maximum(acc_ref[...] + b1_ref[...], 0.0)          # ReLU (f32)
        # Block-diagonal second stage: out[:, p] = sum_j h[:, p*H+j] * w2[p, j]
        o = jnp.dot(h, w2bd_ref[...], preferred_element_type=jnp.float32)
        o_ref[...] = (o + b2_ref[...]).astype(o_ref.dtype)


def _flatten_params(params: OrderedDict):
    B = next(iter(params.values())).shape[0]
    return jnp.concatenate(
        [p.reshape(B, -1).astype(jnp.float32) for p in params.values()],
        axis=-1)                                                   # (B, D)


def loss_learning_fused(params: OrderedDict, prof_weights):
    """Fused forward: returns (B, P) — one predicted loss per professor."""
    x = _flatten_params(params)
    B, D = x.shape

    W1, b1, W2, b2 = (prof_weights[k] for k in ("W1", "b1", "W2", "b2"))
    P, D_w, H = W1.shape
    assert D_w == D
    PH = P * H
    PH_pad = _round_up(PH, 128)          # lane-dense hidden axis
    P_pad = _round_up(P, 128)            # lane-dense output axis

    # ---- host-side reshapes (plain JAX glue, fused by XLA) ------------------
    w1_all = jnp.transpose(W1, (1, 0, 2)).reshape(D, PH)           # (D, P*H)
    b1_all = jnp.zeros((1, PH_pad), jnp.float32).at[0, :PH].set(
        b1.reshape(PH).astype(jnp.float32))                        # (1, PH_pad)
    # Block-diagonal second layer with w2 folded in:
    #   w2bd[p*H + j, q] = W2[p, j, 0] if q == p else 0
    w2 = W2[:, :, 0].astype(jnp.float32)                           # (P, H)
    eye = jnp.eye(P, dtype=jnp.float32)
    w2bd_core = (w2[:, :, None] * eye[:, None, :]).reshape(PH, P)  # (P*H, P)
    w2bd = jnp.zeros((PH_pad, P_pad), jnp.float32).at[:PH, :P].set(w2bd_core)
    b2_all = jnp.zeros((1, P_pad), jnp.float32).at[0, :P].set(
        b2.reshape(P).astype(jnp.float32))                         # (1, P_pad)

    # ---- padding / tiling ----------------------------------------------------
    B_pad = _round_up(max(B, 1), _B_TILE)
    if D <= _D_TILE_MAX:
        d_tile = _round_up(D, 128)
        D_pad = d_tile
    else:
        d_tile = _D_TILE_MAX
        D_pad = _round_up(D, d_tile)

    xb = jnp.zeros((B_pad, D_pad), jnp.bfloat16).at[:B, :D].set(
        x.astype(jnp.bfloat16))
    w1b = jnp.zeros((D_pad, PH_pad), jnp.bfloat16).at[:D, :PH].set(
        w1_all.astype(jnp.bfloat16))

    grid = (B_pad // _B_TILE, D_pad // d_tile)

    out = pl.pallas_call(
        _fused_kernel,
        out_shape=jax.ShapeDtypeStruct((B_pad, P_pad), jnp.float32),
        grid=grid,
        in_specs=[
            pl.BlockSpec((_B_TILE, d_tile), lambda b, d: (b, d)),  # x tile
            pl.BlockSpec((d_tile, PH_pad), lambda b, d: (d, 0)),   # W1 fused
            pl.BlockSpec((1, PH_pad), lambda b, d: (0, 0)),        # b1
            pl.BlockSpec((PH_pad, P_pad), lambda b, d: (0, 0)),    # W2 blockdiag
            pl.BlockSpec((1, P_pad), lambda b, d: (0, 0)),         # b2
        ],
        out_specs=pl.BlockSpec((_B_TILE, P_pad), lambda b, d: (b, 0)),
        scratch_shapes=[pltpu.VMEM((_B_TILE, PH_pad), jnp.float32)],
        compiler_params=pltpu.CompilerParams(
            dimension_semantics=("parallel", "arbitrary"),
            vmem_limit_bytes=32 * 1024 * 1024,
        ),
    )(xb, w1b, b1_all, w2bd, b2_all)

    return out[:B, :P]                                             # (B, P)


def loss_learning_forward(params: OrderedDict, prof_weights):
    """LossLearning.forward: list with one (B, 1) prediction per professor."""
    out = loss_learning_fused(params, prof_weights)                # (B, P)
    P = out.shape[-1]
    return list(jnp.split(out, P, axis=-1))


def eval_student(params: OrderedDict, prof_weights):
    """LossLearning.eval_student: sum of professor predictions -> (B, 1)."""
    out = loss_learning_fused(params, prof_weights)
    return out.sum(axis=-1, keepdims=True)


def _init_professors(key, nprofessors, in_dim, hidden):
    kw1, kb1, kw2, kb2 = jax.random.split(key, 4)
    scale1 = 1.0 / jnp.sqrt(in_dim)
    scale2 = 1.0 / jnp.sqrt(hidden)
    return {
        "W1": scale1 * jax.random.normal(
            kw1, (nprofessors, in_dim, hidden), jnp.float32),
        "b1": scale1 * jax.random.normal(
            kb1, (nprofessors, hidden), jnp.float32),
        "W2": scale2 * jax.random.normal(
            kw2, (nprofessors, hidden, 1), jnp.float32),
        "b2": scale2 * jax.random.normal(
            kb2, (nprofessors, 1), jnp.float32),
    }


if __name__ == "__main__":
    key = jax.random.PRNGKey(0)
    k_params, k_prof = jax.random.split(key)

    B = 2            # batch of student parameter sets
    P = 3            # nprofessors
    H = 32           # professor hidden width

    # Synthetic task-model parameters (batched, as in forward()).
    kp = jax.random.split(k_params, 4)
    params = OrderedDict([
        ("layer1.weight", jax.random.normal(kp[0], (B, 8, 4), jnp.float32)),
        ("layer1.bias",   jax.random.normal(kp[1], (B, 8), jnp.float32)),
        ("layer2.weight", jax.random.normal(kp[2], (B, 4, 8), jnp.float32)),
        ("layer2.bias",   jax.random.normal(kp[3], (B, 4), jnp.float32)),
    ])
    D = sum(math.prod(v.shape[1:]) for v in params.values())

    prof_weights = _init_professors(k_prof, P, D, H)

    preds = loss_learning_forward(params, prof_weights)
    preds = [jax.block_until_ready(p) for p in preds]
    assert len(preds) == P and all(p.shape == (B, 1) for p in preds)

    # Correctness check against a plain-JAX reference using the same bf16
    # cast of x / W1 that the kernel streams through the MXU.
    x_f32 = jnp.concatenate([v.reshape(B, -1) for v in params.values()],
                            axis=-1)
    x_bf = x_f32.astype(jnp.bfloat16).astype(jnp.float32)
    for p in range(P):
        w1_bf = prof_weights["W1"][p].astype(jnp.bfloat16).astype(jnp.float32)
        h = jnp.maximum(x_bf @ w1_bf + prof_weights["b1"][p], 0.0)
        ref = h @ prof_weights["W2"][p] + prof_weights["b2"][p]
        assert jnp.allclose(preds[p], ref, atol=2e-3, rtol=2e-3), (
            p, preds[p], ref)

    student_sum = jax.block_until_ready(eval_student(params, prof_weights))
    assert student_sum.shape == (B, 1)
    ref_sum = sum(preds)
    assert jnp.allclose(student_sum, ref_sum, atol=2e-3, rtol=2e-3)

    print("KERNEL_OK")
</pallas_src>

<mosaic_0001>
module attributes {stable_mosaic.version = 11 : i64} {
  func.func @_fused_kernel(%arg0: i32, %arg1: i32, %arg2: memref<8x128xbf16, #tpu.memory_space<vmem>>, %arg3: memref<128x128xbf16, #tpu.memory_space<vmem>>, %arg4: memref<1x128xf32, #tpu.memory_space<vmem>>, %arg5: memref<128x128xf32, #tpu.memory_space<vmem>>, %arg6: memref<1x128xf32, #tpu.memory_space<vmem>>, %arg7: memref<8x128xf32, #tpu.memory_space<vmem>>, %arg8: memref<8x128xf32, #tpu.memory_space<vmem>>) attributes {dimension_semantics = [#tpu.dimension_semantics<parallel>, #tpu.dimension_semantics<arbitrary>], iteration_bounds = array<i64: 1, 1>, scalar_prefetch = 0 : i64, scratch_operands = 1 : i64, tpu.core_type = #tpu.core_type<tc>, window_params = [{transform_indices = @transform_0, window_bounds = array<i64: 8, 128>}, {transform_indices = @transform_1, window_bounds = array<i64: 128, 128>}, {pipeline_mode = #tpu.pipeline_mode<synchronous>, transform_indices = @transform_2, window_bounds = array<i64: 1, 128>}, {pipeline_mode = #tpu.pipeline_mode<synchronous>, transform_indices = @transform_3, window_bounds = array<i64: 128, 128>}, {pipeline_mode = #tpu.pipeline_mode<synchronous>, transform_indices = @transform_4, window_bounds = array<i64: 1, 128>}, {transform_indices = @transform_5, window_bounds = array<i64: 8, 128>}]} {
    %c0_i32 = arith.constant 0 : i32
    %0 = arith.cmpi eq, %arg1, %c0_i32 : i32
    %1 = arith.extui %0 : i1 to i32
    %c0_i32_0 = arith.constant 0 : i32
    %2 = arith.cmpi ne, %1, %c0_i32_0 : i32
    scf.if %2 {
      %cst_10 = arith.constant 0.000000e+00 : f32
      %12 = vector.broadcast %cst_10 : f32 to vector<8x128xf32>
      %c0_11 = arith.constant 0 : index
      %c0_12 = arith.constant 0 : index
      %13 = vector.load %arg8[%c0_11, %c0_12] : memref<8x128xf32, #tpu.memory_space<vmem>>, vector<8x128xf32>
      tpu.vector_store %arg8[%c0_11, %c0_12], %12 {strides = array<i32>} : memref<8x128xf32, #tpu.memory_space<vmem>>, vector<8x128xf32>,
    } else {
    }
    %c0 = arith.constant 0 : index
    %c0_1 = arith.constant 0 : index
    %3 = vector.load %arg8[%c0, %c0_1] : memref<8x128xf32, #tpu.memory_space<vmem>>, vector<8x128xf32>
    %c0_2 = arith.constant 0 : index
    %c0_3 = arith.constant 0 : index
    %4 = vector.load %arg2[%c0_2, %c0_3] : memref<8x128xbf16, #tpu.memory_space<vmem>>, vector<8x128xbf16>
    %c0_4 = arith.constant 0 : index
    %c0_5 = arith.constant 0 : index
    %5 = vector.load %arg3[%c0_4, %c0_5] : memref<128x128xbf16, #tpu.memory_space<vmem>>, vector<128x128xbf16>
    %cst = arith.constant dense<0.000000e+00> : vector<8x128xf32>
    %6 = tpu.matmul %4, %5, %cst {dimension_numbers = #tpu.dot_dimension_numbers<[1], [0], [0], [1], [0, 0, 1, 1], [], []>} : vector<8x128xbf16>, vector<128x128xbf16>, vector<8x128xf32> -> vector<8x128xf32>
    %7 = arith.addf %3, %6 : vector<8x128xf32>
    %c0_6 = arith.constant 0 : index
    %c0_7 = arith.constant 0 : index
    %8 = vector.load %arg8[%c0_6, %c0_7] : memref<8x128xf32, #tpu.memory_space<vmem>>, vector<8x128xf32>
    tpu.vector_store %arg8[%c0_6, %c0_7], %7 {strides = array<i32>} : memref<8x128xf32, #tpu.memory_space<vmem>>, vector<8x128xf32>,
    %c0_i32_8 = arith.constant 0 : i32
    %9 = arith.cmpi eq, %arg1, %c0_i32_8 : i32
    %10 = arith.extui %9 : i1 to i32
    %c0_i32_9 = arith.constant 0 : i32
    %11 = arith.cmpi ne, %10, %c0_i32_9 : i32
    scf.if %11 {
      %c0_10 = arith.constant 0 : index
      %c0_11 = arith.constant 0 : index
      %12 = vector.load %arg8[%c0_10, %c0_11] : memref<8x128xf32, #tpu.memory_space<vmem>>, vector<8x128xf32>
      %c0_12 = arith.constant 0 : index
      %c0_13 = arith.constant 0 : index
      %13 = vector.load %arg4[%c0_12, %c0_13] : memref<1x128xf32, #tpu.memory_space<vmem>>, vector<1x128xf32>
      %14 = vector.broadcast %13 : vector<1x128xf32> to vector<8x128xf32>
      %15 = arith.addf %12, %14 : vector<8x128xf32>
      %cst_14 = arith.constant 0.000000e+00 : f32
      %16 = vector.broadcast %cst_14 : f32 to vector<8x128xf32>
      %17 = arith.maximumf %15, %16 : vector<8x128xf32>
      %c0_15 = arith.constant 0 : index
      %c0_16 = arith.constant 0 : index
      %18 = vector.load %arg5[%c0_15, %c0_16] : memref<128x128xf32, #tpu.memory_space<vmem>>, vector<128x128xf32>
      %cst_17 = arith.constant dense<0.000000e+00> : vector<8x128xf32>
      %19 = tpu.matmul %17, %18, %cst_17 {dimension_numbers = #tpu.dot_dimension_numbers<[1], [0], [0], [1], [0, 0, 1, 1], [], []>} : vector<8x128xf32>, vector<128x128xf32>, vector<8x128xf32> -> vector<8x128xf32>
      %c0_18 = arith.constant 0 : index
      %c0_19 = arith.constant 0 : index
      %20 = vector.load %arg6[%c0_18, %c0_19] : memref<1x128xf32, #tpu.memory_space<vmem>>, vector<1x128xf32>
      %21 = vector.broadcast %20 : vector<1x128xf32> to vector<8x128xf32>
      %22 = arith.addf %19, %21 : vector<8x128xf32>
      %c0_20 = arith.constant 0 : index
      %c0_21 = arith.constant 0 : index
      %23 = vector.load %arg7[%c0_20, %c0_21] : memref<8x128xf32, #tpu.memory_space<vmem>>, vector<8x128xf32>
      tpu.vector_store %arg7[%c0_20, %c0_21], %22 {strides = array<i32>} : memref<8x128xf32, #tpu.memory_space<vmem>>, vector<8x128xf32>,
    } else {
    }
    return
  }
  func.func @transform_0(%arg0: i32, %arg1: i32) -> (i32, i32) {
    %c0_i32 = arith.constant 0 : i32
    return %arg0, %arg1 : i32, i32
  }
  func.func @transform_1(%arg0: i32, %arg1: i32) -> (i32, i32) {
    %c0_i32 = arith.constant 0 : i32
    %c0_i32_0 = arith.constant 0 : i32
    return %arg1, %c0_i32 : i32, i32
  }
  func.func @transform_2(%arg0: i32, %arg1: i32) -> (i32, i32) {
    %c0_i32 = arith.constant 0 : i32
    %c0_i32_0 = arith.constant 0 : i32
    %c0_i32_1 = arith.constant 0 : i32
    return %c0_i32, %c0_i32_0 : i32, i32
  }
  func.func @transform_3(%arg0: i32, %arg1: i32) -> (i32, i32) {
    %c0_i32 = arith.constant 0 : i32
    %c0_i32_0 = arith.constant 0 : i32
    %c0_i32_1 = arith.constant 0 : i32
    return %c0_i32, %c0_i32_0 : i32, i32
  }
  func.func @transform_4(%arg0: i32, %arg1: i32) -> (i32, i32) {
    %c0_i32 = arith.constant 0 : i32
    %c0_i32_0 = arith.constant 0 : i32
    %c0_i32_1 = arith.constant 0 : i32
    return %c0_i32, %c0_i32_0 : i32, i32
  }
  func.func @transform_5(%arg0: i32, %arg1: i32) -> (i32, i32) {
    %c0_i32 = arith.constant 0 : i32
    %c0_i32_0 = arith.constant 0 : i32
    return %arg0, %c0_i32 : i32, i32
  }
}

</mosaic_0001>

<llo_original>
// kernel: tpu_custom_call.1
$region0: #{tpu_custom_call.1}
  #allocation0 [shape = 'u32[]', space=smem, size = 0x4, offset = 0x4, fixed_abs, tag = 'smem constant byte address 0x4 - core index']
  #allocation1 [shape = 'u32[144,128]{1,0:T(1,128)}', space=vmem, size = 0x12000, scoped, tag = 'internal scratch']
  #allocation2 [shape = 'f32[8,128]{1,0:T(8,128)}', space=vmem, size = 0x1000, scoped, tag = 'scratch operand']
  %s0 = inlined_call_operand.hbm [shape: bf16[8,128], index: 0, kind: input, shape index: {}]
  %s1 = inlined_call_operand.hbm [shape: bf16[128,128], index: 1, kind: input, shape index: {}]
  %s2 = inlined_call_operand.vmem [shape: f32[1,128], index: 2, kind: input, shape index: {}]
  %s3 = inlined_call_operand.hbm [shape: f32[128,128], index: 3, kind: input, shape index: {}]
  %s4 = inlined_call_operand.vmem [shape: f32[1,128], index: 4, kind: input, shape index: {}]
  %s5 = inlined_call_operand.hbm [shape: f32[8,128], index: 5, kind: output, shape index: {}]
  %s6 = sld [smem:[#allocation0]]
  $region50: #{tpu_custom_call.1} parent=0
    _
  %s8 = ssub.s32 1, %s6
  %s9 = scalar_select 0, %s8, %s6
  $region1: #{tpu_custom_call.1} parent=0
    #allocation3 [shape = 'u8[2048]{0}', space=vmem, size = 0x800, scoped, tag = 'input window, operand 0, single buffered']
    #allocation4 [shape = 's32[1]{0}', space=sflag, size = 0x4, scoped, tag = 'scoped memory for tpu_custom_call.1']
    #allocation5 [shape = 's32[1]{0}', space=sflag, size = 0x4, scoped, tag = 'scoped memory for tpu_custom_call.1']
    #allocation6 [shape = 'u8[32768]{0}', space=vmem, size = 0x8000, scoped, tag = 'input window, operand 1, single buffered']
    #allocation7 [shape = 's32[1]{0}', space=sflag, size = 0x4, scoped, tag = 'scoped memory for tpu_custom_call.1']
    #allocation8 [shape = 'u8[65536]{0}', space=vmem, size = 0x10000, scoped, tag = 'input window, operand 3, single buffered']
    #allocation9 [shape = 'u8[4096]{0}', space=vmem, size = 0x1000, scoped, tag = 'output window, operand 0, single buffered']
    %10 = vsyncpa [#allocation4], 0
    %11 = vsyncpa [#allocation7], 0
    %12 = vsyncpa [#allocation5], 0
    // Predicated region
    $region2: #{tpu_custom_call.1} parent=1 // pred_check
      _
    $region3: #{tpu_custom_call.1} parent=1 // pred_check_branch
      %14 = sbr.rel (0) target = $region5
    $region4: #{tpu_custom_call.1} parent=1 // pred_region
      %s16 = ssub.s32 64, 64
      %17 = vsyncadd [#allocation4], %s16
      %s19 = sshll.u32 [#allocation3], 4
      %s20 = int_to_ptr.vmem [resolvable:$true] %s19
      %22 = dma.hbm_to_vmem [thread:$0]  %s0, 64, %s20, [#allocation4]
    $region5: #{tpu_custom_call.1} parent=1 // pred_fallthru
      _
    // Predicated region
    $region6: #{tpu_custom_call.1} parent=1 // pred_check
      _
    $region7: #{tpu_custom_call.1} parent=1 // pred_check_branch
      %24 = sbr.rel (0) target = $region9
    $region8: #{tpu_custom_call.1} parent=1 // pred_region
      %s26 = ssub.s32 1024, 1024
      %27 = vsyncadd [#allocation7], %s26
      %s28 = sshll.u32 [#allocation6], 4
      %s29 = int_to_ptr.vmem [resolvable:$true] %s28
      %34 = dma.hbm_to_vmem [thread:$0]  %s1, 1024, %s29, [#allocation7], 64, 64, 4
    $region9: #{tpu_custom_call.1} parent=1 // pred_fallthru
      _
    // Predicated region
    $region10: #{tpu_custom_call.1} parent=1 // pred_check
      _
    $region11: #{tpu_custom_call.1} parent=1 // pred_check_branch
      %36 = sbr.rel (0) target = $region13
    $region12: #{tpu_custom_call.1} parent=1 // pred_region
      _
    $region13: #{tpu_custom_call.1} parent=1 // pred_fallthru
      _
    // Predicated region
    $region14: #{tpu_custom_call.1} parent=1 // pred_check
      _
    $region15: #{tpu_custom_call.1} parent=1 // pred_check_branch
      %38 = sbr.rel (0) target = $region17
    $region16: #{tpu_custom_call.1} parent=1 // pred_region
      %s40 = ssub.s32 2048, 2048
      %41 = vsyncadd [#allocation7], %s40
      %s42 = sshll.u32 [#allocation8], 4
      %s43 = int_to_ptr.vmem [resolvable:$true] %s42
      %48 = dma.hbm_to_vmem [thread:$0]  %s3, 2048, %s43, [#allocation7], 128, 128, 8
    $region17: #{tpu_custom_call.1} parent=1 // pred_fallthru
      _
    // Predicated region
    $region18: #{tpu_custom_call.1} parent=1 // pred_check
      _
    $region19: #{tpu_custom_call.1} parent=1 // pred_check_branch
      %50 = sbr.rel (0) target = $region21
    $region20: #{tpu_custom_call.1} parent=1 // pred_region
      _
    $region21: #{tpu_custom_call.1} parent=1 // pred_fallthru
      _
    // Predicated region
    $region22: #{tpu_custom_call.1} parent=1 // pred_check
      _
    $region23: #{tpu_custom_call.1} parent=1 // pred_check_branch
      %52 = sbr.rel (0) target = $region25
    $region24: #{tpu_custom_call.1} parent=1 // pred_region
      %53 = dma.done [#allocation4], 64
    $region25: #{tpu_custom_call.1} parent=1 // pred_fallthru
      _
    // Predicated region
    $region26: #{tpu_custom_call.1} parent=1 // pred_check
      _
    $region27: #{tpu_custom_call.1} parent=1 // pred_check_branch
      %55 = sbr.rel (0) target = $region29
    $region28: #{tpu_custom_call.1} parent=1 // pred_region
      %56 = dma.done [#allocation7], 1024
    $region29: #{tpu_custom_call.1} parent=1 // pred_fallthru
      _
    // Predicated region
    $region30: #{tpu_custom_call.1} parent=1 // pred_check
      _
    $region31: #{tpu_custom_call.1} parent=1 // pred_check_branch
      %58 = sbr.rel (0) target = $region33
    $region32: #{tpu_custom_call.1} parent=1 // pred_region
      %59 = dma.done [#allocation7], 2048
    $region33: #{tpu_custom_call.1} parent=1 // pred_fallthru
      _
    %p61 = scmp.eq.s32.totalorder 0, 0
    // Predicated region
    $region34: #{tpu_custom_call.1} parent=1 // pred_check
      %p62 = pneg %p61
    $region35: #{tpu_custom_call.1} parent=1 // pred_check_branch
      %64 = sbr.rel (%p62) target = $region37
    $region36: #{tpu_custom_call.1} parent=1 // pred_region
      %65 = vst [vmem:[#allocation2] sm:$0xff] 0.0
    $region37: #{tpu_custom_call.1} parent=1 // pred_fallthru
      _
    %v66 = vld [vmem:[#allocation2] sm:$0xff]
    %v67 = vld [vmem:[#allocation3] sm:$0xf]
    %v68 = vld [vmem:[#allocation6] sm:$0xf]
    %v69 = vld [vmem:[#allocation6 + $0x4] sm:$0xf]
    %v70 = vld [vmem:[#allocation6 + $0x8] sm:$0xf]
    %v71 = vld [vmem:[#allocation6 + $0xc] sm:$0xf]
    %v72 = vld [vmem:[#allocation6 + $0x10] sm:$0xf]
    %v73 = vld [vmem:[#allocation6 + $0x14] sm:$0xf]
    %v74 = vld [vmem:[#allocation6 + $0x18] sm:$0xf]
    %v75 = vld [vmem:[#allocation6 + $0x1c] sm:$0xf]
    %v76 = vld [vmem:[#allocation6 + $0x20] sm:$0xf]
    %v77 = vld [vmem:[#allocation6 + $0x24] sm:$0xf]
    %v78 = vld [vmem:[#allocation6 + $0x28] sm:$0xf]
    %v79 = vld [vmem:[#allocation6 + $0x2c] sm:$0xf]
    %v80 = vld [vmem:[#allocation6 + $0x30] sm:$0xf]
    %v81 = vld [vmem:[#allocation6 + $0x34] sm:$0xf]
    %v82 = vld [vmem:[#allocation6 + $0x38] sm:$0xf]
    %v83 = vld [vmem:[#allocation6 + $0x3c] sm:$0xf]
    %v100 = vunpack.c.l.b16 %v68
    %v101 = vunpack.c.l.b16 %v69
    %v102 = vunpack.c.l.b16 %v70
    %v103 = vunpack.c.l.b16 %v71
    %v104 = vunpack.c.l.b16 %v72
    %v105 = vunpack.c.l.b16 %v73
    %v106 = vunpack.c.l.b16 %v74
    %v107 = vunpack.c.l.b16 %v75
    %v108 = vunpack.c.l.b16 %v76
    %v109 = vunpack.c.l.b16 %v77
    %v110 = vunpack.c.l.b16 %v78
    %v111 = vunpack.c.l.b16 %v79
    %v112 = vunpack.c.l.b16 %v80
    %v113 = vunpack.c.l.b16 %v81
    %v114 = vunpack.c.l.b16 %v82
    %v115 = vunpack.c.l.b16 %v83
    %v116 = vpack.c.b16 %v101, %v100
    %v117 = vpack.c.b16 %v103, %v102
    %v118 = vpack.c.b16 %v105, %v104
    %v119 = vpack.c.b16 %v107, %v106
    %v120 = vpack.c.b16 %v109, %v108
    %v121 = vpack.c.b16 %v111, %v110
    %v122 = vpack.c.b16 %v113, %v112
    %v123 = vpack.c.b16 %v115, %v114
    %132 = vmatprep.subr.bf16.mxu0 0
    %133 = vmatpush1.bf16.msra.mxu0 %v116
    %134 = vmatprep.subr.bf16.mxu0 0
    %135 = vmatpush1.bf16.msra.mxu0 %v117
    %136 = vmatprep.subr.bf16.mxu0 0
    %137 = vmatpush1.bf16.msra.mxu0 %v118
    %138 = vmatprep.subr.bf16.mxu0 0
    %139 = vmatpush1.bf16.msra.mxu0 %v119
    %140 = vmatprep.subr.bf16.mxu0 0
    %141 = vmatpush1.bf16.msra.mxu0 %v120
    %142 = vmatprep.subr.bf16.mxu0 0
    %143 = vmatpush1.bf16.msra.mxu0 %v121
    %144 = vmatprep.subr.bf16.mxu0 0
    %145 = vmatpush1.bf16.msra.mxu0 %v122
    %146 = vmatprep.subr.bf16.mxu0 0
    %147 = vmatpush1.bf16.msra.mxu0 %v123
    %148 = vmatprep.subr.bf16.mxu0 0
    %149 = vmatpush1.bf16.msra.mxu0 0
    %150 = vmatprep.subr.bf16.mxu0 0
    %151 = vmatpush1.bf16.msra.mxu0 0
    %152 = vmatprep.subr.bf16.mxu0 0
    %153 = vmatpush1.bf16.msra.mxu0 0
    %154 = vmatprep.subr.bf16.mxu0 0
    %155 = vmatpush1.bf16.msra.mxu0 0
    %156 = vmatprep.subr.bf16.mxu0 0
    %157 = vmatpush1.bf16.msra.mxu0 0
    %158 = vmatprep.subr.bf16.mxu0 0
    %159 = vmatpush1.bf16.msra.mxu0 0
    %160 = vmatprep.subr.bf16.mxu0 0
    %161 = vmatpush1.bf16.msra.mxu0 0
    %162 = vmatprep.subr.bf16.mxu0 0
    %163 = vmatpush1.bf16.msra.mxu0 0
    %164 = vmatprep.mubr.bf16.mxu0 0
    %165 = vmatmul.mubr.bf16.gmra.mrb[0].mxu0 %v67
    %v166 = vpop.f32.mrb[0].mxu0
    %v167 = vadd.f32 0.0, %v166
    %v168 = vpop.f32.mrb[0].mxu0
    %v169 = vpop.f32.mrb[0].mxu0
    %v170 = vpop.f32.mrb[0].mxu0
    %171 = vdwg.mxu0
    %v172 = vadd.f32 %v66, %v167
    %173 = vst [vmem:[#allocation2] sm:$0xff] %v172
    // Predicated region
    $region38: #{tpu_custom_call.1} parent=1 // pred_check
      %p174 = pneg %p61
    $region39: #{tpu_custom_call.1} parent=1 // pred_check_branch
      %176 = sbr.rel (%p174) target = $region41
    $region40: #{tpu_custom_call.1} parent=1 // pred_region
      %v177 = vld [vmem:[#allocation2] sm:$0xff]
      %v178 = vld [vmem:[%s2] sm:$0x1]
      %v180 = vlaneseq
      %v181 = vshrl.u32 %v180, 7
      %v182 = vsub.s32 0, %v181
      %v183 = vrot.slane %v178, %v182
      %v185 = vadd.f32 %v177, %v183
      %v186 = vmax.f32 %v185, 0.0
      %v187 = vld [vmem:[#allocation8] sm:$0xff]
      %v188 = vld [vmem:[#allocation8 + $0x8] sm:$0xff]
      %v189 = vld [vmem:[#allocation8 + $0x10] sm:$0xff]
      %v190 = vld [vmem:[#allocation8 + $0x18] sm:$0xff]
      %v191 = vld [vmem:[#allocation8 + $0x20] sm:$0xff]
      %v192 = vld [vmem:[#allocation8 + $0x28] sm:$0xff]
      %v193 = vld [vmem:[#allocation8 + $0x30] sm:$0xff]
      %v194 = vld [vmem:[#allocation8 + $0x38] sm:$0xff]
      %v195 = vld [vmem:[#allocation8 + $0x40] sm:$0xff]
      %v196 = vld [vmem:[#allocation8 + $0x48] sm:$0xff]
      %v197 = vld [vmem:[#allocation8 + $0x50] sm:$0xff]
      %v198 = vld [vmem:[#allocation8 + $0x58] sm:$0xff]
      %v199 = vld [vmem:[#allocation8 + $0x60] sm:$0xff]
      %v200 = vld [vmem:[#allocation8 + $0x68] sm:$0xff]
      %v201 = vld [vmem:[#allocation8 + $0x70] sm:$0xff]
      %v202 = vld [vmem:[#allocation8 + $0x78] sm:$0xff]
      %v203 = vld [vmem:[%s4] sm:$0x1]
      %v205 = vlaneseq
      %v206 = vshrl.u32 %v205, 7
      %v207 = vsub.s32 0, %v206
      %v208 = vrot.slane %v203, %v207
      %210 = vmatprep.subr.mxu0 0.0
      %211 = vmatpush1.msra.mxu0 %v187
      %212 = vmatprep.subr.mxu0 0.0
      %213 = vmatpush1.msra.mxu0 %v188
      %214 = vmatprep.subr.mxu0 0.0
      %215 = vmatpush1.msra.mxu0 %v189
      %216 = vmatprep.subr.mxu0 0.0
      %217 = vmatpush1.msra.mxu0 %v190
      %218 = vmatprep.subr.mxu0 0.0
      %219 = vmatpush1.msra.mxu0 %v191
      %220 = vmatprep.subr.mxu0 0.0
      %221 = vmatpush1.msra.mxu0 %v192
      %222 = vmatprep.subr.mxu0 0.0
      %223 = vmatpush1.msra.mxu0 %v193
      %224 = vmatprep.subr.mxu0 0.0
      %225 = vmatpush1.msra.mxu0 %v194
      %226 = vmatprep.subr.mxu0 0.0
      %227 = vmatpush1.msra.mxu0 %v195
      %228 = vmatprep.subr.mxu0 0.0
      %229 = vmatpush1.msra.mxu0 %v196
      %230 = vmatprep.subr.mxu0 0.0
      %231 = vmatpush1.msra.mxu0 %v197
      %232 = vmatprep.subr.mxu0 0.0
      %233 = vmatpush1.msra.mxu0 %v198
      %234 = vmatprep.subr.mxu0 0.0
      %235 = vmatpush1.msra.mxu0 %v199
      %236 = vmatprep.subr.mxu0 0.0
      %237 = vmatpush1.msra.mxu0 %v200
      %238 = vmatprep.subr.mxu0 0.0
      %239 = vmatpush1.msra.mxu0 %v201
      %240 = vmatprep.subr.mxu0 0.0
      %241 = vmatpush1.msra.mxu0 %v202
      %242 = vmatprep.subr.mxu0 0.0
      %243 = vmatpush1.msra.mxu0 0.0
      %244 = vmatprep.subr.mxu0 0.0
      %245 = vmatpush1.msra.mxu0 0.0
      %246 = vmatprep.subr.mxu0 0.0
      %247 = vmatpush1.msra.mxu0 0.0
      %248 = vmatprep.subr.mxu0 0.0
      %249 = vmatpush1.msra.mxu0 0.0
      %250 = vmatprep.subr.mxu0 0.0
      %251 = vmatpush1.msra.mxu0 0.0
      %252 = vmatprep.subr.mxu0 0.0
      %253 = vmatpush1.msra.mxu0 0.0
      %254 = vmatprep.subr.mxu0 0.0
      %255 = vmatpush1.msra.mxu0 0.0
      %256 = vmatprep.subr.mxu0 0.0
      %257 = vmatpush1.msra.mxu0 0.0
      %258 = vmatprep.subr.mxu0 0.0
      %259 = vmatpush1.msra.mxu0 0.0
      %260 = vmatprep.subr.mxu0 0.0
      %261 = vmatpush1.msra.mxu0 0.0
      %262 = vmatprep.subr.mxu0 0.0
      %263 = vmatpush1.msra.mxu0 0.0
      %264 = vmatprep.subr.mxu0 0.0
      %265 = vmatpush1.msra.mxu0 0.0
      %266 = vmatprep.subr.mxu0 0.0
      %267 = vmatpush1.msra.mxu0 0.0
      %268 = vmatprep.subr.mxu0 0.0
      %269 = vmatpush1.msra.mxu0 0.0
      %270 = vmatprep.subr.mxu0 0.0
      %271 = vmatpush1.msra.mxu0 0.0
      %272 = vmatprep.subr.mxu0 0.0
      %273 = vmatpush1.msra.mxu0 0.0
      %274 = vmatprep.mubr.f32.mxu0 0.0
      %275 = vmatmul.mubr.f32.gmra.mrb[0].mxu0 %v186
      %v276 = vpop.f32.mrb[0].mxu0
      %v277 = vadd.f32 %v208, %v276
      %v278 = vpop.f32.mrb[0].mxu0
      %279 = vdwg.mxu0
      %280 = vst [vmem:[#allocation9] sm:$0xff] %v277
    $region41: #{tpu_custom_call.1} parent=1 // pred_fallthru
      _
    // Predicated region
    $region42: #{tpu_custom_call.1} parent=1 // pred_check
      _
    $region43: #{tpu_custom_call.1} parent=1 // pred_check_branch
      %282 = sbr.rel (0) target = $region45
    $region44: #{tpu_custom_call.1} parent=1 // pred_region
      %s284 = ssub.s32 128, 128
      %285 = vsyncadd [#allocation5], %s284
      %s287 = sshll.u32 [#allocation9], 4
      %s288 = int_to_ptr.vmem [resolvable:$true] %s287
      %290 = dma.vmem_to_hbm [thread:$0]  %s288, 128, %s5, [#allocation5]
    $region45: #{tpu_custom_call.1} parent=1 // pred_fallthru
      _
    // Predicated region
    $region46: #{tpu_custom_call.1} parent=1 // pred_check
      _
    $region47: #{tpu_custom_call.1} parent=1 // pred_check_branch
      %292 = sbr.rel (0) target = $region49
    $region48: #{tpu_custom_call.1} parent=1 // pred_region
      %293 = dma.done [#allocation5], 128
    $region49: #{tpu_custom_call.1} parent=1 // pred_fallthru
      _
    %294 = vsyncpa [#allocation4], 1
    %295 = vsyncpa [#allocation7], 1
    %296 = vsyncpa [#allocation5], 1

</llo_original>
